<compile_context>
chip_gen: v7x
topology: tpu7x:2x2x1
jax: 0.10.0
libtpu: 0.0.40
codegen_flags: <defaults>
</compile_context>

<pallas_src>
import numpy as np
import jax
import jax.numpy as jnp
from jax.experimental import pallas as pl
from jax.experimental.pallas import tpu as pltpu

LN_EPS = 1e-5


def _cparams():
    return pltpu.CompilerParams(
        dimension_semantics=("parallel",),
        vmem_limit_bytes=48 * 1024 * 1024,
    )


def _full_spec(arr):
    nd = arr.ndim
    return pl.BlockSpec(arr.shape, lambda b, _nd=nd: (0,) * _nd)


# ----------------------------------------------------------------------------
# Shared VariancePredictor math (operates on values already loaded from refs).
#   Conv1d(k=3,p=1) -> LayerNorm -> ReLU   (x2)   -> Linear(F,1) -> ReLU
# ----------------------------------------------------------------------------
def _conv_ln_relu(h, w, b, g, bt):
    """h: (L, Cin); w: (3*Cin, Cout) fused-tap weight; b/g/bt: (1, Cout)."""
    L = h.shape[0]
    row = jax.lax.broadcasted_iota(jnp.int32, (L, 1), 0)
    # circular roll + boundary masking == zero-padded k=3 conv neighbours
    h_prev = jnp.where(row == 0, 0.0, pltpu.roll(h, shift=1, axis=0))
    h_next = jnp.where(row == L - 1, 0.0, pltpu.roll(h, shift=L - 1, axis=0))
    hcat = jnp.concatenate([h_prev, h, h_next], axis=1)          # (L, 3*Cin)
    y = jnp.dot(hcat, w, preferred_element_type=jnp.float32) + b
    mu = jnp.mean(y, axis=-1, keepdims=True)
    var = jnp.mean((y - mu) ** 2, axis=-1, keepdims=True)
    y = (y - mu) * jax.lax.rsqrt(var + LN_EPS)
    y = y * g + bt
    return jnp.maximum(y, 0.0)


def _predictor_row(x, w1, b1, g1, bt1, w2, b2, g2, bt2, wl, bl):
    """Full VariancePredictor; returns the (1, L) prediction row (lane-dense)."""
    h = _conv_ln_relu(x, w1, b1, g1, bt1)
    h = _conv_ln_relu(h, w2, b2, g2, bt2)
    # Linear(F, 1) + ReLU as (1,F) x (L,F)^T -> (1, L): lane-dense output row,
    # no N=1 MXU matmul and no masked (L,1) stores.
    pred = jax.lax.dot_general(wl, h, (((1,), (1,)), ((), ())),
                               preferred_element_type=jnp.float32)
    return jnp.maximum(pred + bl, 0.0)                           # (1, L)


# ----------------------------------------------------------------------------
# Kernel 1: standalone VariancePredictor (duration predictor on encoder output)
# ----------------------------------------------------------------------------
def _variance_predictor_kernel(x_ref,
                               w1_ref, b1_ref, g1_ref, bt1_ref,
                               w2_ref, b2_ref, g2_ref, bt2_ref,
                               wl_ref, bl_ref, out_ref):
    out_ref[0] = _predictor_row(
        x_ref[0],
        w1_ref[...], b1_ref[...], g1_ref[...], bt1_ref[...],
        w2_ref[...], b2_ref[...], g2_ref[...], bt2_ref[...],
        wl_ref[...], bl_ref[...])


def variance_predictor(p, x):
    """x: (B, L, D) -> (B, L)  (matches torch .squeeze() in training mode)."""
    B, L, Din = x.shape
    out = pl.pallas_call(
        _variance_predictor_kernel,
        out_shape=jax.ShapeDtypeStruct((B, 1, L), jnp.float32),
        grid=(B,),
        in_specs=[pl.BlockSpec((1, L, Din), lambda b: (b, 0, 0)),
                  _full_spec(p["conv1_w"]), _full_spec(p["conv1_b"]),
                  _full_spec(p["ln1_g"]), _full_spec(p["ln1_b"]),
                  _full_spec(p["conv2_w"]), _full_spec(p["conv2_b"]),
                  _full_spec(p["ln2_g"]), _full_spec(p["ln2_b"]),
                  _full_spec(p["lin_w"]), _full_spec(p["lin_b"])],
        out_specs=pl.BlockSpec((1, 1, L), lambda b: (b, 0, 0)),
        compiler_params=_cparams(),
    )(x, p["conv1_w"], p["conv1_b"], p["ln1_g"], p["ln1_b"],
      p["conv2_w"], p["conv2_b"], p["ln2_g"], p["ln2_b"],
      p["lin_w"], p["lin_b"])
    return out[:, 0, :]


# ----------------------------------------------------------------------------
# Kernel 2: LengthRegulator.LR — build the 0/1 alignment matrix from int32
# cumulative durations (iota masks) and multiply with x on the MXU.
# ----------------------------------------------------------------------------
def _length_regulator_kernel(x_ref, start_ref, dur_ref, out_ref):
    x = x_ref[0]                                    # (L, D)
    start = start_ref[0]                            # (1, L) int32
    dur = dur_ref[0]                                # (1, L) int32
    T = out_ref.shape[1]
    L = x.shape[0]
    t_idx = jax.lax.broadcasted_iota(jnp.int32, (T, L), 0)
    align = ((t_idx >= start) & (t_idx < start + dur)).astype(jnp.float32)
    out_ref[0] = jnp.dot(align, x, preferred_element_type=jnp.float32)


def length_regulate(x, durations, mel_max_length=None):
    """x: (B, L, D); durations: host int array (B, L) (mirrors .cpu().numpy())."""
    durations = np.asarray(durations)
    B, L, D = x.shape
    T = int(durations.sum(axis=-1).max())           # expand_max_len (host, static)
    csum = np.cumsum(durations, axis=-1)
    start_np = np.concatenate([np.zeros((B, 1), csum.dtype), csum[:, :-1]], axis=-1)
    start = jnp.asarray(start_np.astype(np.int32)).reshape(B, 1, L)
    dur = jnp.asarray(durations.astype(np.int32)).reshape(B, 1, L)

    out = pl.pallas_call(
        _length_regulator_kernel,
        out_shape=jax.ShapeDtypeStruct((B, T, D), jnp.float32),
        grid=(B,),
        in_specs=[pl.BlockSpec((1, L, D), lambda b: (b, 0, 0)),
                  pl.BlockSpec((1, 1, L), lambda b: (b, 0, 0)),
                  pl.BlockSpec((1, 1, L), lambda b: (b, 0, 0))],
        out_specs=pl.BlockSpec((1, T, D), lambda b: (b, 0, 0)),
        compiler_params=_cparams(),
    )(x, start, dur)

    if mel_max_length is not None and mel_max_length > T:
        out = jnp.pad(out, ((0, 0), (0, mel_max_length - T), (0, 0)))
    return out


# ----------------------------------------------------------------------------
# Kernel 3: fused pitch+energy predictors + bucketize-embeddings + residual add.
# lr_out is read from HBM once; the summed output is written once.
# Bucketize(target, bins) is expressed as exact interval tests lo[j] < t <= hi[j]
# (lo = [-inf, bins], hi = [bins, +inf]) -> one-hot (T, NB) -> MXU matmul with
# the embedding table (no float-equality on a summed index).
# ----------------------------------------------------------------------------
def _pitch_energy_fused_kernel(lr_ref,
                               w1s_ref, b1s_ref, g1s_ref, bt1s_ref,
                               w2s_ref, b2s_ref, g2s_ref, bt2s_ref,
                               wls_ref, bls_ref,
                               tgts_ref, los_ref, his_ref, tables_ref,
                               out_ref, ppred_ref, epred_ref):
    lr = lr_ref[0]                                   # (T, D) — single HBM read
    tgts = tgts_ref[0]                               # (T, 2) float32

    def branch(i):
        pred = _predictor_row(lr,
                              w1s_ref[i], b1s_ref[i], g1s_ref[i], bt1s_ref[i],
                              w2s_ref[i], b2s_ref[i], g2s_ref[i], bt2s_ref[i],
                              wls_ref[i], bls_ref[i])            # (1, T)
        tgt = tgts[:, i:i + 1]                                   # (T, 1)
        sel = ((los_ref[i] < tgt) & (tgt <= his_ref[i])).astype(jnp.float32)  # (T, NB)
        emb = jnp.dot(sel, tables_ref[i], preferred_element_type=jnp.float32) # (T, D)
        return pred, emb

    pitch_pred, pitch_emb = branch(0)
    energy_pred, energy_emb = branch(1)
    out_ref[0] = lr + pitch_emb + energy_emb          # fused residual add
    ppred_ref[0] = pitch_pred
    epred_ref[0] = energy_pred


def fused_pitch_energy(pitch_params, energy_params, pitch_bins, energy_bins,
                       pitch_table, energy_table, lr_out, pitch_target, energy_target):
    B, T, D = lr_out.shape
    NB = pitch_table.shape[0]

    def stack(k):
        return jnp.stack([pitch_params[k], energy_params[k]], axis=0)

    w1s, b1s, g1s, bt1s = stack("conv1_w"), stack("conv1_b"), stack("ln1_g"), stack("ln1_b")
    w2s, b2s, g2s, bt2s = stack("conv2_w"), stack("conv2_b"), stack("ln2_g"), stack("ln2_b")
    wls, bls = stack("lin_w"), stack("lin_b")

    neg_inf = jnp.array([-jnp.inf], jnp.float32)
    pos_inf = jnp.array([jnp.inf], jnp.float32)
    los = jnp.stack([jnp.concatenate([neg_inf, pitch_bins]),
                     jnp.concatenate([neg_inf, energy_bins])]).reshape(2, 1, NB)
    his = jnp.stack([jnp.concatenate([pitch_bins, pos_inf]),
                     jnp.concatenate([energy_bins, pos_inf])]).reshape(2, 1, NB)
    tables = jnp.stack([pitch_table, energy_table])                     # (2, NB, D)
    tgts = jnp.stack([pitch_target, energy_target], axis=-1).astype(jnp.float32)  # (B,T,2)

    consts = (w1s, b1s, g1s, bt1s, w2s, b2s, g2s, bt2s, wls, bls)
    out, ppred, epred = pl.pallas_call(
        _pitch_energy_fused_kernel,
        out_shape=(jax.ShapeDtypeStruct((B, T, D), jnp.float32),
                   jax.ShapeDtypeStruct((B, 1, T), jnp.float32),
                   jax.ShapeDtypeStruct((B, 1, T), jnp.float32)),
        grid=(B,),
        in_specs=[pl.BlockSpec((1, T, D), lambda b: (b, 0, 0))]
                 + [_full_spec(a) for a in consts]
                 + [pl.BlockSpec((1, T, 2), lambda b: (b, 0, 0)),
                    _full_spec(los), _full_spec(his), _full_spec(tables)],
        out_specs=(pl.BlockSpec((1, T, D), lambda b: (b, 0, 0)),
                   pl.BlockSpec((1, 1, T), lambda b: (b, 0, 0)),
                   pl.BlockSpec((1, 1, T), lambda b: (b, 0, 0))),
        compiler_params=_cparams(),
    )(lr_out, *consts, tgts, los, his, tables)
    return out, ppred[:, 0, :], epred[:, 0, :]


# ----------------------------------------------------------------------------
# Parameter construction (deterministic, mirrors the module's __init__ shapes).
# PyTorch Conv1d weight (Cout, Cin, K) maps to the fused layout used here via
#   w_fused = w_torch.permute(2, 1, 0).reshape(3 * Cin, Cout)
# PyTorch Linear weight (1, F) is used as-is as the (1, F) row vector.
# ----------------------------------------------------------------------------
def init_variance_predictor_params(key, din, fsize):
    ks = jax.random.split(key, 6)
    s1 = 1.0 / np.sqrt(din * 3)
    s2 = 1.0 / np.sqrt(fsize * 3)
    sl = 1.0 / np.sqrt(fsize)
    return {
        "conv1_w": jax.random.uniform(ks[0], (3 * din, fsize), jnp.float32, -s1, s1),
        "conv1_b": jax.random.uniform(ks[1], (1, fsize), jnp.float32, -s1, s1),
        "ln1_g": jnp.ones((1, fsize), jnp.float32),
        "ln1_b": jnp.zeros((1, fsize), jnp.float32),
        "conv2_w": jax.random.uniform(ks[2], (3 * fsize, fsize), jnp.float32, -s2, s2),
        "conv2_b": jax.random.uniform(ks[3], (1, fsize), jnp.float32, -s2, s2),
        "ln2_g": jnp.ones((1, fsize), jnp.float32),
        "ln2_b": jnp.zeros((1, fsize), jnp.float32),
        "lin_w": jax.random.uniform(ks[4], (1, fsize), jnp.float32, -sl, sl),
        "lin_b": jax.random.uniform(ks[5], (1, 1), jnp.float32, -sl, sl),
    }


def init_variance_adaptor_params(key, encoder_dim, filter_size, n_bins,
                                 f0_min, f0_max, energy_min, energy_max):
    kd, kp, ke, kpe, kee = jax.random.split(key, 5)
    return {
        "duration_predictor": init_variance_predictor_params(kd, encoder_dim, filter_size),
        "pitch_predictor": init_variance_predictor_params(kp, encoder_dim, filter_size),
        "energy_predictor": init_variance_predictor_params(ke, encoder_dim, filter_size),
        "pitch_bins": jnp.exp(jnp.linspace(np.log(f0_min), np.log(f0_max), n_bins - 1)
                              ).astype(jnp.float32),
        "energy_bins": jnp.linspace(energy_min, energy_max, n_bins - 1).astype(jnp.float32),
        "pitch_embedding": jax.random.normal(kpe, (n_bins, encoder_dim), jnp.float32),
        "energy_embedding": jax.random.normal(kee, (n_bins, encoder_dim), jnp.float32),
    }


# ----------------------------------------------------------------------------
# VarianceAdaptor.forward (training-mode path, targets provided)
# ----------------------------------------------------------------------------
def variance_adaptor_forward(params, x, duration_target, pitch_target, energy_target,
                             alpha=1.0, beta=1.0, gamma=1.0, mel_max_length=None):
    # Dropout is identity here (deterministic forward); alpha/beta/gamma only
    # affect the inference path.
    # TODO(synk): inference path (predicted durations -> host roundtrip -> LR,
    #             (exp(pred)-1)*control bucketize) not wired up; only the
    #             training forward (targets given) is implemented.
    dur_pred = variance_predictor(params["duration_predictor"], x)            # (B, L)
    lr_out = length_regulate(x, duration_target, mel_max_length)              # (B, T, D)
    out, pitch_pred, energy_pred = fused_pitch_energy(
        params["pitch_predictor"], params["energy_predictor"],
        params["pitch_bins"], params["energy_bins"],
        params["pitch_embedding"], params["energy_embedding"],
        lr_out, pitch_target, energy_target)
    return out, dur_pred, pitch_pred, energy_pred


if __name__ == "__main__":
    # small config consistent with FastSpeechConfig
    B, L = 2, 8
    ENCODER_DIM = 32
    FILTER_SIZE = 64
    N_BINS = 16
    F0_MIN, F0_MAX = 71.0, 795.8
    E_MIN, E_MAX = 0.0, 100.0

    key = jax.random.PRNGKey(0)
    kparam, kx, kd, kp, ke = jax.random.split(key, 5)

    params = init_variance_adaptor_params(kparam, ENCODER_DIM, FILTER_SIZE, N_BINS,
                                          F0_MIN, F0_MAX, E_MIN, E_MAX)

    x = jax.random.normal(kx, (B, L, ENCODER_DIM), jnp.float32)
    duration_target = np.asarray(jax.random.randint(kd, (B, L), 1, 4))        # host ints
    T = int(duration_target.sum(axis=-1).max())
    pitch_target = jax.random.uniform(kp, (B, T), jnp.float32, 80.0, 700.0)
    energy_target = jax.random.uniform(ke, (B, T), jnp.float32, 0.0, 100.0)

    out, dur_pred, pitch_pred, energy_pred = variance_adaptor_forward(
        params, x, duration_target, pitch_target, energy_target)

    jax.block_until_ready((out, dur_pred, pitch_pred, energy_pred))
    assert out.shape == (B, T, ENCODER_DIM)
    assert dur_pred.shape == (B, L)
    assert pitch_pred.shape == (B, T)
    assert energy_pred.shape == (B, T)
    print("KERNEL_OK")
</pallas_src>

<mosaic_0001>
module attributes {stable_mosaic.version = 11 : i64} {
  func.func @_variance_predictor_kernel(%arg0: i32, %arg1: memref<1x8x32xf32, #tpu.memory_space<vmem>>, %arg2: memref<96x64xf32, #tpu.memory_space<vmem>>, %arg3: memref<1x64xf32, #tpu.memory_space<vmem>>, %arg4: memref<1x64xf32, #tpu.memory_space<vmem>>, %arg5: memref<1x64xf32, #tpu.memory_space<vmem>>, %arg6: memref<192x64xf32, #tpu.memory_space<vmem>>, %arg7: memref<1x64xf32, #tpu.memory_space<vmem>>, %arg8: memref<1x64xf32, #tpu.memory_space<vmem>>, %arg9: memref<1x64xf32, #tpu.memory_space<vmem>>, %arg10: memref<1x64xf32, #tpu.memory_space<vmem>>, %arg11: memref<1x1xf32, #tpu.memory_space<vmem>>, %arg12: memref<1x1x8xf32, #tpu.memory_space<vmem>>) attributes {dimension_semantics = [#tpu.dimension_semantics<parallel>], iteration_bounds = array<i64: 2>, scalar_prefetch = 0 : i64, scratch_operands = 0 : i64, tpu.core_type = #tpu.core_type<tc>, window_params = [{transform_indices = @transform_0, window_bounds = array<i64: 1, 8, 32>}, {pipeline_mode = #tpu.pipeline_mode<synchronous>, transform_indices = @transform_1, window_bounds = array<i64: 96, 64>}, {pipeline_mode = #tpu.pipeline_mode<synchronous>, transform_indices = @transform_2, window_bounds = array<i64: 1, 64>}, {pipeline_mode = #tpu.pipeline_mode<synchronous>, transform_indices = @transform_3, window_bounds = array<i64: 1, 64>}, {pipeline_mode = #tpu.pipeline_mode<synchronous>, transform_indices = @transform_4, window_bounds = array<i64: 1, 64>}, {pipeline_mode = #tpu.pipeline_mode<synchronous>, transform_indices = @transform_5, window_bounds = array<i64: 192, 64>}, {pipeline_mode = #tpu.pipeline_mode<synchronous>, transform_indices = @transform_6, window_bounds = array<i64: 1, 64>}, {pipeline_mode = #tpu.pipeline_mode<synchronous>, transform_indices = @transform_7, window_bounds = array<i64: 1, 64>}, {pipeline_mode = #tpu.pipeline_mode<synchronous>, transform_indices = @transform_8, window_bounds = array<i64: 1, 64>}, {pipeline_mode = #tpu.pipeline_mode<synchronous>, transform_indices = @transform_9, window_bounds = array<i64: 1, 64>}, {pipeline_mode = #tpu.pipeline_mode<synchronous>, transform_indices = @transform_10, window_bounds = array<i64: 1, 1>}, {transform_indices = @transform_11, window_bounds = array<i64: 1, 1, 8>}]} {
    %c0 = arith.constant 0 : index
    %c0_0 = arith.constant 0 : index
    %c0_1 = arith.constant 0 : index
    %0 = vector.load %arg1[%c0, %c0_0, %c0_1] : memref<1x8x32xf32, #tpu.memory_space<vmem>>, vector<1x8x32xf32>
    %1 = vector.shape_cast %0 : vector<1x8x32xf32> to vector<8x32xf32>
    %c0_2 = arith.constant 0 : index
    %c0_3 = arith.constant 0 : index
    %2 = vector.load %arg2[%c0_2, %c0_3] : memref<96x64xf32, #tpu.memory_space<vmem>>, vector<96x64xf32>
    %c0_4 = arith.constant 0 : index
    %c0_5 = arith.constant 0 : index
    %3 = vector.load %arg3[%c0_4, %c0_5] : memref<1x64xf32, #tpu.memory_space<vmem>>, vector<1x64xf32>
    %c0_6 = arith.constant 0 : index
    %c0_7 = arith.constant 0 : index
    %4 = vector.load %arg4[%c0_6, %c0_7] : memref<1x64xf32, #tpu.memory_space<vmem>>, vector<1x64xf32>
    %c0_8 = arith.constant 0 : index
    %c0_9 = arith.constant 0 : index
    %5 = vector.load %arg5[%c0_8, %c0_9] : memref<1x64xf32, #tpu.memory_space<vmem>>, vector<1x64xf32>
    %c0_10 = arith.constant 0 : index
    %c0_11 = arith.constant 0 : index
    %6 = vector.load %arg6[%c0_10, %c0_11] : memref<192x64xf32, #tpu.memory_space<vmem>>, vector<192x64xf32>
    %c0_12 = arith.constant 0 : index
    %c0_13 = arith.constant 0 : index
    %7 = vector.load %arg7[%c0_12, %c0_13] : memref<1x64xf32, #tpu.memory_space<vmem>>, vector<1x64xf32>
    %c0_14 = arith.constant 0 : index
    %c0_15 = arith.constant 0 : index
    %8 = vector.load %arg8[%c0_14, %c0_15] : memref<1x64xf32, #tpu.memory_space<vmem>>, vector<1x64xf32>
    %c0_16 = arith.constant 0 : index
    %c0_17 = arith.constant 0 : index
    %9 = vector.load %arg9[%c0_16, %c0_17] : memref<1x64xf32, #tpu.memory_space<vmem>>, vector<1x64xf32>
    %c0_18 = arith.constant 0 : index
    %c0_19 = arith.constant 0 : index
    %10 = vector.load %arg10[%c0_18, %c0_19] : memref<1x64xf32, #tpu.memory_space<vmem>>, vector<1x64xf32>
    %c0_20 = arith.constant 0 : index
    %c0_21 = arith.constant 0 : index
    %11 = vector.load %arg11[%c0_20, %c0_21] : memref<1x1xf32, #tpu.memory_space<vmem>>, vector<1x1xf32>
    %12 = tpu.iota {dimensions = array<i32: 0>} : vector<8x1xi32>
    %c0_i32 = arith.constant 0 : i32
    %13 = vector.broadcast %c0_i32 : i32 to vector<8x1xi32>
    %14 = arith.cmpi eq, %12, %13 : vector<8x1xi32>
    %c1_i32 = arith.constant 1 : i32
    %15 = tpu.dynamic_rotate %1 by %c1_i32 dim 0 : vector<8x32xf32>, i32 -> vector<8x32xf32>
    %cst = arith.constant 0.000000e+00 : f32
    %16 = vector.shape_cast %14 : vector<8x1xi1> to vector<8x1xi1>
    %17 = vector.broadcast %16 : vector<8x1xi1> to vector<8x32xi1>
    %18 = vector.broadcast %cst : f32 to vector<8x32xf32>
    %19 = arith.select %17, %18, %15 : vector<8x32xi1>, vector<8x32xf32>
    %c7_i32 = arith.constant 7 : i32
    %20 = vector.broadcast %c7_i32 : i32 to vector<8x1xi32>
    %21 = arith.cmpi eq, %12, %20 : vector<8x1xi32>
    %c7_i32_22 = arith.constant 7 : i32
    %22 = tpu.dynamic_rotate %1 by %c7_i32_22 dim 0 : vector<8x32xf32>, i32 -> vector<8x32xf32>
    %cst_23 = arith.constant 0.000000e+00 : f32
    %23 = vector.shape_cast %21 : vector<8x1xi1> to vector<8x1xi1>
    %24 = vector.broadcast %23 : vector<8x1xi1> to vector<8x32xi1>
    %25 = vector.broadcast %cst_23 : f32 to vector<8x32xf32>
    %26 = arith.select %24, %25, %22 : vector<8x32xi1>, vector<8x32xf32>
    %27 = tpu.concatenate %19, %1, %26 in 1 : vector<8x32xf32>, vector<8x32xf32>, vector<8x32xf32> -> vector<8x96xf32>
    %cst_24 = arith.constant dense<0.000000e+00> : vector<8x64xf32>
    %28 = tpu.matmul %27, %2, %cst_24 {dimension_numbers = #tpu.dot_dimension_numbers<[1], [0], [0], [1], [0, 0, 1, 1], [], []>} : vector<8x96xf32>, vector<96x64xf32>, vector<8x64xf32> -> vector<8x64xf32>
    %29 = vector.broadcast %3 : vector<1x64xf32> to vector<8x64xf32>
    %30 = arith.addf %28, %29 : vector<8x64xf32>
    %cst_25 = arith.constant dense<0.000000e+00> : vector<8xf32>
    %31 = vector.multi_reduction <add>, %30, %cst_25 [1] : vector<8x64xf32> to vector<8xf32>
    %32 = vector.shape_cast %31 : vector<8xf32> to vector<8x1xf32>
    %cst_26 = arith.constant 6.400000e+01 : f32
    %33 = vector.broadcast %cst_26 : f32 to vector<8x1xf32>
    %34 = arith.divf %32, %33 : vector<8x1xf32>
    %35 = vector.broadcast %34 : vector<8x1xf32> to vector<8x64xf32>
    %36 = arith.subf %30, %35 : vector<8x64xf32>
    %37 = arith.mulf %36, %36 : vector<8x64xf32>
    %cst_27 = arith.constant dense<0.000000e+00> : vector<8xf32>
    %38 = vector.multi_reduction <add>, %37, %cst_27 [1] : vector<8x64xf32> to vector<8xf32>
    %39 = vector.shape_cast %38 : vector<8xf32> to vector<8x1xf32>
    %cst_28 = arith.constant 6.400000e+01 : f32
    %40 = vector.broadcast %cst_28 : f32 to vector<8x1xf32>
    %41 = arith.divf %39, %40 : vector<8x1xf32>
    %42 = vector.broadcast %34 : vector<8x1xf32> to vector<8x64xf32>
    %43 = arith.subf %30, %42 : vector<8x64xf32>
    %cst_29 = arith.constant 9.99999974E-6 : f32
    %44 = vector.broadcast %cst_29 : f32 to vector<8x1xf32>
    %45 = arith.addf %41, %44 : vector<8x1xf32>
    %46 = math.rsqrt %45 : vector<8x1xf32>
    %47 = vector.broadcast %46 : vector<8x1xf32> to vector<8x64xf32>
    %48 = arith.mulf %43, %47 : vector<8x64xf32>
    %49 = vector.broadcast %4 : vector<1x64xf32> to vector<8x64xf32>
    %50 = arith.mulf %48, %49 : vector<8x64xf32>
    %51 = vector.broadcast %5 : vector<1x64xf32> to vector<8x64xf32>
    %52 = arith.addf %50, %51 : vector<8x64xf32>
    %cst_30 = arith.constant 0.000000e+00 : f32
    %53 = vector.broadcast %cst_30 : f32 to vector<8x64xf32>
    %54 = arith.maximumf %52, %53 : vector<8x64xf32>
    %55 = tpu.iota {dimensions = array<i32: 0>} : vector<8x1xi32>
    %c0_i32_31 = arith.constant 0 : i32
    %56 = vector.broadcast %c0_i32_31 : i32 to vector<8x1xi32>
    %57 = arith.cmpi eq, %55, %56 : vector<8x1xi32>
    %c1_i32_32 = arith.constant 1 : i32
    %58 = tpu.dynamic_rotate %54 by %c1_i32_32 dim 0 : vector<8x64xf32>, i32 -> vector<8x64xf32>
    %cst_33 = arith.constant 0.000000e+00 : f32
    %59 = vector.shape_cast %57 : vector<8x1xi1> to vector<8x1xi1>
    %60 = vector.broadcast %59 : vector<8x1xi1> to vector<8x64xi1>
    %61 = vector.broadcast %cst_33 : f32 to vector<8x64xf32>
    %62 = arith.select %60, %61, %58 : vector<8x64xi1>, vector<8x64xf32>
    %c7_i32_34 = arith.constant 7 : i32
    %63 = vector.broadcast %c7_i32_34 : i32 to vector<8x1xi32>
    %64 = arith.cmpi eq, %55, %63 : vector<8x1xi32>
    %c7_i32_35 = arith.constant 7 : i32
    %65 = tpu.dynamic_rotate %54 by %c7_i32_35 dim 0 : vector<8x64xf32>, i32 -> vector<8x64xf32>
    %cst_36 = arith.constant 0.000000e+00 : f32
    %66 = vector.shape_cast %64 : vector<8x1xi1> to vector<8x1xi1>
    %67 = vector.broadcast %66 : vector<8x1xi1> to vector<8x64xi1>
    %68 = vector.broadcast %cst_36 : f32 to vector<8x64xf32>
    %69 = arith.select %67, %68, %65 : vector<8x64xi1>, vector<8x64xf32>
    %70 = tpu.concatenate %62, %54, %69 in 1 : vector<8x64xf32>, vector<8x64xf32>, vector<8x64xf32> -> vector<8x192xf32>
    %cst_37 = arith.constant dense<0.000000e+00> : vector<8x64xf32>
    %71 = tpu.matmul %70, %6, %cst_37 {dimension_numbers = #tpu.dot_dimension_numbers<[1], [0], [0], [1], [0, 0, 1, 1], [], []>} : vector<8x192xf32>, vector<192x64xf32>, vector<8x64xf32> -> vector<8x64xf32>
    %72 = vector.broadcast %7 : vector<1x64xf32> to vector<8x64xf32>
    %73 = arith.addf %71, %72 : vector<8x64xf32>
    %cst_38 = arith.constant dense<0.000000e+00> : vector<8xf32>
    %74 = vector.multi_reduction <add>, %73, %cst_38 [1] : vector<8x64xf32> to vector<8xf32>
    %75 = vector.shape_cast %74 : vector<8xf32> to vector<8x1xf32>
    %cst_39 = arith.constant 6.400000e+01 : f32
    %76 = vector.broadcast %cst_39 : f32 to vector<8x1xf32>
    %77 = arith.divf %75, %76 : vector<8x1xf32>
    %78 = vector.broadcast %77 : vector<8x1xf32> to vector<8x64xf32>
    %79 = arith.subf %73, %78 : vector<8x64xf32>
    %80 = arith.mulf %79, %79 : vector<8x64xf32>
    %cst_40 = arith.constant dense<0.000000e+00> : vector<8xf32>
    %81 = vector.multi_reduction <add>, %80, %cst_40 [1] : vector<8x64xf32> to vector<8xf32>
    %82 = vector.shape_cast %81 : vector<8xf32> to vector<8x1xf32>
    %cst_41 = arith.constant 6.400000e+01 : f32
    %83 = vector.broadcast %cst_41 : f32 to vector<8x1xf32>
    %84 = arith.divf %82, %83 : vector<8x1xf32>
    %85 = vector.broadcast %77 : vector<8x1xf32> to vector<8x64xf32>
    %86 = arith.subf %73, %85 : vector<8x64xf32>
    %cst_42 = arith.constant 9.99999974E-6 : f32
    %87 = vector.broadcast %cst_42 : f32 to vector<8x1xf32>
    %88 = arith.addf %84, %87 : vector<8x1xf32>
    %89 = math.rsqrt %88 : vector<8x1xf32>
    %90 = vector.broadcast %89 : vector<8x1xf32> to vector<8x64xf32>
    %91 = arith.mulf %86, %90 : vector<8x64xf32>
    %92 = vector.broadcast %8 : vector<1x64xf32> to vector<8x64xf32>
    %93 = arith.mulf %91, %92 : vector<8x64xf32>
    %94 = vector.broadcast %9 : vector<1x64xf32> to vector<8x64xf32>
    %95 = arith.addf %93, %94 : vector<8x64xf32>
    %cst_43 = arith.constant 0.000000e+00 : f32
    %96 = vector.broadcast %cst_43 : f32 to vector<8x64xf32>
    %97 = arith.maximumf %95, %96 : vector<8x64xf32>
    %cst_44 = arith.constant dense<0.000000e+00> : vector<1x8xf32>
    %98 = tpu.matmul %10, %97, %cst_44 {dimension_numbers = #tpu.dot_dimension_numbers<[1], [1], [0], [0], [0, 0, 1, 0], [], []>} : vector<1x64xf32>, vector<8x64xf32>, vector<1x8xf32> -> vector<1x8xf32>
    %99 = vector.broadcast %11 : vector<1x1xf32> to vector<1x8xf32>
    %100 = arith.addf %98, %99 : vector<1x8xf32>
    %cst_45 = arith.constant 0.000000e+00 : f32
    %101 = vector.broadcast %cst_45 : f32 to vector<1x8xf32>
    %102 = arith.maximumf %100, %101 : vector<1x8xf32>
    %c0_46 = arith.constant 0 : index
    %c0_47 = arith.constant 0 : index
    %c0_48 = arith.constant 0 : index
    %103 = vector.load %arg12[%c0_46, %c0_47, %c0_48] : memref<1x1x8xf32, #tpu.memory_space<vmem>>, vector<1x1x8xf32>
    %104 = vector.shape_cast %103 : vector<1x1x8xf32> to vector<1x8xf32>
    %105 = vector.shape_cast %102 : vector<1x8xf32> to vector<1x1x8xf32>
    tpu.vector_store %arg12[%c0_46, %c0_47, %c0_48], %105 {strides = array<i32>} : memref<1x1x8xf32, #tpu.memory_space<vmem>>, vector<1x1x8xf32>,
    return
  }
  func.func @transform_0(%arg0: i32) -> (i32, i32, i32) {
    %c0_i32 = arith.constant 0 : i32
    %c0_i32_0 = arith.constant 0 : i32
    %c0_i32_1 = arith.constant 0 : i32
    return %arg0, %c0_i32, %c0_i32_0 : i32, i32, i32
  }
  func.func @transform_1(%arg0: i32) -> (i32, i32) {
    %c0_i32 = arith.constant 0 : i32
    %c0_i32_0 = arith.constant 0 : i32
    %c0_i32_1 = arith.constant 0 : i32
    return %c0_i32, %c0_i32_0 : i32, i32
  }
  func.func @transform_2(%arg0: i32) -> (i32, i32) {
    %c0_i32 = arith.constant 0 : i32
    %c0_i32_0 = arith.constant 0 : i32
    %c0_i32_1 = arith.constant 0 : i32
    return %c0_i32, %c0_i32_0 : i32, i32
  }
  func.func @transform_3(%arg0: i32) -> (i32, i32) {
    %c0_i32 = arith.constant 0 : i32
    %c0_i32_0 = arith.constant 0 : i32
    %c0_i32_1 = arith.constant 0 : i32
    return %c0_i32, %c0_i32_0 : i32, i32
  }
  func.func @transform_4(%arg0: i32) -> (i32, i32) {
    %c0_i32 = arith.constant 0 : i32
    %c0_i32_0 = arith.constant 0 : i32
    %c0_i32_1 = arith.constant 0 : i32
    return %c0_i32, %c0_i32_0 : i32, i32
  }
  func.func @transform_5(%arg0: i32) -> (i32, i32) {
    %c0_i32 = arith.constant 0 : i32
    %c0_i32_0 = arith.constant 0 : i32
    %c0_i32_1 = arith.constant 0 : i32
    return %c0_i32, %c0_i32_0 : i32, i32
  }
  func.func @transform_6(%arg0: i32) -> (i32, i32) {
    %c0_i32 = arith.constant 0 : i32
    %c0_i32_0 = arith.constant 0 : i32
    %c0_i32_1 = arith.constant 0 : i32
    return %c0_i32, %c0_i32_0 : i32, i32
  }
  func.func @transform_7(%arg0: i32) -> (i32, i32) {
    %c0_i32 = arith.constant 0 : i32
    %c0_i32_0 = arith.constant 0 : i32
    %c0_i32_1 = arith.constant 0 : i32
    return %c0_i32, %c0_i32_0 : i32, i32
  }
  func.func @transform_8(%arg0: i32) -> (i32, i32) {
    %c0_i32 = arith.constant 0 : i32
    %c0_i32_0 = arith.constant 0 : i32
    %c0_i32_1 = arith.constant 0 : i32
    return %c0_i32, %c0_i32_0 : i32, i32
  }
  func.func @transform_9(%arg0: i32) -> (i32, i32) {
    %c0_i32 = arith.constant 0 : i32
    %c0_i32_0 = arith.constant 0 : i32
    %c0_i32_1 = arith.constant 0 : i32
    return %c0_i32, %c0_i32_0 : i32, i32
  }
  func.func @transform_10(%arg0: i32) -> (i32, i32) {
    %c0_i32 = arith.constant 0 : i32
    %c0_i32_0 = arith.constant 0 : i32
    %c0_i32_1 = arith.constant 0 : i32
    return %c0_i32, %c0_i32_0 : i32, i32
  }
  func.func @transform_11(%arg0: i32) -> (i32, i32, i32) {
    %c0_i32 = arith.constant 0 : i32
    %c0_i32_0 = arith.constant 0 : i32
    %c0_i32_1 = arith.constant 0 : i32
    return %arg0, %c0_i32, %c0_i32_0 : i32, i32, i32
  }
}

</mosaic_0001>

<llo_original>
// kernel: tpu_custom_call.1
$region0: #{tpu_custom_call.1}
  #allocation0 [shape = 'u32[]', space=smem, size = 0x4, offset = 0x4, fixed_abs, tag = 'smem constant byte address 0x4 - core index']
  #allocation1 [shape = 'u32[144,128]{1,0:T(1,128)}', space=vmem, size = 0x12000, scoped, tag = 'internal scratch']
  #allocation2 [shape = 'f32[1,1]{1,0:T(1,128)S(1)}', space=vmem, size = 0x200, scoped, tag = 'scoped memory for tpu_custom_call.1']
  %s0 = inlined_call_operand.vmem [shape: f32[2,8,32], index: 0, kind: input, shape index: {}]
  %s1 = inlined_call_operand.vmem [shape: f32[96,64], index: 1, kind: input, shape index: {}]
  %s2 = inlined_call_operand.vmem [shape: f32[1,64], index: 2, kind: input, shape index: {}]
  %s3 = inlined_call_operand.vmem [shape: f32[1,64], index: 3, kind: input, shape index: {}]
  %s4 = inlined_call_operand.vmem [shape: f32[1,64], index: 4, kind: input, shape index: {}]
  %s5 = inlined_call_operand.vmem [shape: f32[192,64], index: 5, kind: input, shape index: {}]
  %s6 = inlined_call_operand.vmem [shape: f32[1,64], index: 6, kind: input, shape index: {}]
  %s7 = inlined_call_operand.vmem [shape: f32[1,64], index: 7, kind: input, shape index: {}]
  %s8 = inlined_call_operand.vmem [shape: f32[1,64], index: 8, kind: input, shape index: {}]
  %s9 = inlined_call_operand.vmem [shape: f32[1,64], index: 9, kind: input, shape index: {}]
  %s10 = inlined_call_operand.<no memory space> [shape: f32[1,1], index: 10, kind: input, shape index: {}]
  %s11 = inlined_call_operand.hbm [shape: f32[2,1,8], index: 11, kind: output, shape index: {}]
  %s12 = sld [smem:[#allocation0]]
  $region77: #{tpu_custom_call.1} parent=0
    _
  %s14 = ssub.s32 1, %s12
  %s15 = scalar_select 0, %s14, %s12
  %v16 = vstv %s10
  %17 = vst [vmem:[#allocation2] sm:$0x1] %v16
  $region1: #{tpu_custom_call.1} parent=0
    #allocation3 [shape = 'u8[1024]{0}', space=vmem, size = 0x400, scoped, tag = 'output window, operand 0']
    #allocation4 [shape = 's32[2]{0}', space=sflag, size = 0x8, scoped, tag = 'scoped memory for tpu_custom_call.1']
    %18 = vsyncpa [#allocation4], 0
    %s19 = scalar_lea.sflag [#allocation4], 1
    %20 = vsyncpa %s19, 0
    loop: start=0, step=1, limit=4
    $region2: #{tpu_custom_call.1} parent=1 // loop_pre_header
      _
    $region3: #{tpu_custom_call.1} parent=1 // loop_header
      %s22 = sphi 0, %s26
      %p23 = scmp.ge.s32.totalorder %s22, 4
      %s32 = sphi 0, %s34
      %s35 = sphi 0, %s32
      %s36 = sphi 0, %s35
      %s52 = sphi 0, %s36
      %s56 = sphi 0, %s56
      %s58 = sphi 0, %s56
      %s59 = sphi 0, %s58
      %s73 = sphi 0, %s59
      %s77 = sphi 0, %s77
      %s79 = sphi 0, %s77
      %s80 = sphi 0, %s79
      %s94 = sphi 0, %s80
      %s98 = sphi 0, %s98
      %s100 = sphi 0, %s98
      %s101 = sphi 0, %s100
      %s115 = sphi 0, %s101
      %s119 = sphi 0, %s119
      %s121 = sphi 0, %s119
      %s122 = sphi 0, %s121
      %s136 = sphi 0, %s122
      %s140 = sphi 0, %s140
      %s142 = sphi 0, %s140
      %s143 = sphi 0, %s142
      %s157 = sphi 0, %s143
      %s161 = sphi 0, %s161
      %s163 = sphi 0, %s161
      %s164 = sphi 0, %s163
      %s178 = sphi 0, %s164
      %s182 = sphi 0, %s182
      %s184 = sphi 0, %s182
      %s185 = sphi 0, %s184
      %s199 = sphi 0, %s185
      %s203 = sphi 0, %s203
      %s205 = sphi 0, %s203
      %s206 = sphi 0, %s205
      %s220 = sphi 0, %s206
      %s224 = sphi 0, %s224
      %s226 = sphi 0, %s224
      %s227 = sphi 0, %s226
      %s241 = sphi 0, %s227
      %s245 = sphi 0, %s245
      %s247 = sphi 0, %s245
      %s248 = sphi 0, %s247
      %s262 = sphi 0, %s248
      %s268 = sphi 0, %s270
      %s271 = sphi 0, %s268
      %s272 = sphi 0, %s271
      %s288 = sphi 0, %s272
    $region4: #{tpu_custom_call.1} parent=1 // loop_header_branch
      %25 = sbr.rel (%p23) target = $region8
    $region5: #{tpu_custom_call.1} parent=1 // loop_body
      %s27 = ssub.s32 %s22, 1
      %s28 = ssub.s32 %s22, 2
      %s29 = sadd.s32 %s22, 1
      %s30 = ssub.s32 %s22, %s29
      %p31 = scmp.eq.s32.totalorder %s30, 0
      %s33 = sadd.s32 %s32, 1
      %s34 = scalar_select %p31, %s32, %s33
      %p37 = pneg %p31
      %p38 = scmp.eq.s32.totalorder %s22, 1
      %p39 = por %p37, %p38
      %p40 = scmp.ne.s32.totalorder %s32, %s35
      %p41 = scmp.eq.s32.totalorder %s22, 0
      %p42 = por %p40, %p41
      %p43 = scmp.ne.s32.totalorder %s32, %s35
      %p44 = scmp.eq.s32.totalorder %s27, 1
      %p45 = por %p43, %p44
      %p46 = scmp.ne.s32.totalorder %s35, %s36
      %p47 = scmp.eq.s32.totalorder %s27, 0
      %p48 = por %p46, %p47
      %p49 = scmp.ne.s32.totalorder %s35, %s36
      %p50 = scmp.eq.s32.totalorder %s28, 1
      %p51 = por %p49, %p50
      %p53 = scmp.ne.s32.totalorder %s36, %s52
      %p54 = scmp.eq.s32.totalorder %s28, 0
      %p55 = por %p53, %p54
      %s57 = sadd.s32 %s56, 1
      %p60 = scmp.eq.s32.totalorder %s22, 1
      %p61 = scmp.ne.s32.totalorder %s56, %s58
      %p62 = scmp.eq.s32.totalorder %s22, 0
      %p63 = por %p61, %p62
      %p64 = scmp.ne.s32.totalorder %s56, %s58
      %p65 = scmp.eq.s32.totalorder %s27, 1
      %p66 = por %p64, %p65
      %p67 = scmp.ne.s32.totalorder %s58, %s59
      %p68 = scmp.eq.s32.totalorder %s27, 0
      %p69 = por %p67, %p68
      %p70 = scmp.ne.s32.totalorder %s58, %s59
      %p71 = scmp.eq.s32.totalorder %s28, 1
      %p72 = por %p70, %p71
      %p74 = scmp.ne.s32.totalorder %s59, %s73
      %p75 = scmp.eq.s32.totalorder %s28, 0
      %p76 = por %p74, %p75
      %s78 = sadd.s32 %s77, 1
      %p81 = scmp.eq.s32.totalorder %s22, 1
      %p82 = scmp.ne.s32.totalorder %s77, %s79
      %p83 = scmp.eq.s32.totalorder %s22, 0
      %p84 = por %p82, %p83
      %p85 = scmp.ne.s32.totalorder %s77, %s79
      %p86 = scmp.eq.s32.totalorder %s27, 1
      %p87 = por %p85, %p86
      %p88 = scmp.ne.s32.totalorder %s79, %s80
      %p89 = scmp.eq.s32.totalorder %s27, 0
      %p90 = por %p88, %p89
      %p91 = scmp.ne.s32.totalorder %s79, %s80
      %p92 = scmp.eq.s32.totalorder %s28, 1
      %p93 = por %p91, %p92
      %p95 = scmp.ne.s32.totalorder %s80, %s94
      %p96 = scmp.eq.s32.totalorder %s28, 0
      %p97 = por %p95, %p96
      %s99 = sadd.s32 %s98, 1
      %p102 = scmp.eq.s32.totalorder %s22, 1
      %p103 = scmp.ne.s32.totalorder %s98, %s100
      %p104 = scmp.eq.s32.totalorder %s22, 0
      %p105 = por %p103, %p104
      %p106 = scmp.ne.s32.totalorder %s98, %s100
      %p107 = scmp.eq.s32.totalorder %s27, 1
      %p108 = por %p106, %p107
      %p109 = scmp.ne.s32.totalorder %s100, %s101
      %p110 = scmp.eq.s32.totalorder %s27, 0
      %p111 = por %p109, %p110
      %p112 = scmp.ne.s32.totalorder %s100, %s101
      %p113 = scmp.eq.s32.totalorder %s28, 1
      %p114 = por %p112, %p113
      %p116 = scmp.ne.s32.totalorder %s101, %s115
      %p117 = scmp.eq.s32.totalorder %s28, 0
      %p118 = por %p116, %p117
      %s120 = sadd.s32 %s119, 1
      %p123 = scmp.eq.s32.totalorder %s22, 1
      %p124 = scmp.ne.s32.totalorder %s119, %s121
      %p125 = scmp.eq.s32.totalorder %s22, 0
      %p126 = por %p124, %p125
      %p127 = scmp.ne.s32.totalorder %s119, %s121
      %p128 = scmp.eq.s32.totalorder %s27, 1
      %p129 = por %p127, %p128
      %p130 = scmp.ne.s32.totalorder %s121, %s122
      %p131 = scmp.eq.s32.totalorder %s27, 0
      %p132 = por %p130, %p131
      %p133 = scmp.ne.s32.totalorder %s121, %s122
      %p134 = scmp.eq.s32.totalorder %s28, 1
      %p135 = por %p133, %p134
      %p137 = scmp.ne.s32.totalorder %s122, %s136
      %p138 = scmp.eq.s32.totalorder %s28, 0
      %p139 = por %p137, %p138
      %s141 = sadd.s32 %s140, 1
      %p144 = scmp.eq.s32.totalorder %s22, 1
      %p145 = scmp.ne.s32.totalorder %s140, %s142
      %p146 = scmp.eq.s32.totalorder %s22, 0
      %p147 = por %p145, %p146
      %p148 = scmp.ne.s32.totalorder %s140, %s142
      %p149 = scmp.eq.s32.totalorder %s27, 1
      %p150 = por %p148, %p149
      %p151 = scmp.ne.s32.totalorder %s142, %s143
      %p152 = scmp.eq.s32.totalorder %s27, 0
      %p153 = por %p151, %p152
      %p154 = scmp.ne.s32.totalorder %s142, %s143
      %p155 = scmp.eq.s32.totalorder %s28, 1
      %p156 = por %p154, %p155
      %p158 = scmp.ne.s32.totalorder %s143, %s157
      %p159 = scmp.eq.s32.totalorder %s28, 0
      %p160 = por %p158, %p159
      %s162 = sadd.s32 %s161, 1
      %p165 = scmp.eq.s32.totalorder %s22, 1
      %p166 = scmp.ne.s32.totalorder %s161, %s163
      %p167 = scmp.eq.s32.totalorder %s22, 0
      %p168 = por %p166, %p167
      %p169 = scmp.ne.s32.totalorder %s161, %s163
      %p170 = scmp.eq.s32.totalorder %s27, 1
      %p171 = por %p169, %p170
      %p172 = scmp.ne.s32.totalorder %s163, %s164
      %p173 = scmp.eq.s32.totalorder %s27, 0
      %p174 = por %p172, %p173
      %p175 = scmp.ne.s32.totalorder %s163, %s164
      %p176 = scmp.eq.s32.totalorder %s28, 1
      %p177 = por %p175, %p176
      %p179 = scmp.ne.s32.totalorder %s164, %s178
      %p180 = scmp.eq.s32.totalorder %s28, 0
      %p181 = por %p179, %p180
      %s183 = sadd.s32 %s182, 1
      %p186 = scmp.eq.s32.totalorder %s22, 1
      %p187 = scmp.ne.s32.totalorder %s182, %s184
      %p188 = scmp.eq.s32.totalorder %s22, 0
      %p189 = por %p187, %p188
      %p190 = scmp.ne.s32.totalorder %s182, %s184
      %p191 = scmp.eq.s32.totalorder %s27, 1
      %p192 = por %p190, %p191
      %p193 = scmp.ne.s32.totalorder %s184, %s185
      %p194 = scmp.eq.s32.totalorder %s27, 0
      %p195 = por %p193, %p194
      %p196 = scmp.ne.s32.totalorder %s184, %s185
      %p197 = scmp.eq.s32.totalorder %s28, 1
      %p198 = por %p196, %p197
      %p200 = scmp.ne.s32.totalorder %s185, %s199
      %p201 = scmp.eq.s32.totalorder %s28, 0
      %p202 = por %p200, %p201
      %s204 = sadd.s32 %s203, 1
      %p207 = scmp.eq.s32.totalorder %s22, 1
      %p208 = scmp.ne.s32.totalorder %s203, %s205
      %p209 = scmp.eq.s32.totalorder %s22, 0
      %p210 = por %p208, %p209
      %p211 = scmp.ne.s32.totalorder %s203, %s205
      %p212 = scmp.eq.s32.totalorder %s27, 1
      %p213 = por %p211, %p212
      %p214 = scmp.ne.s32.totalorder %s205, %s206
      %p215 = scmp.eq.s32.totalorder %s27, 0
      %p216 = por %p214, %p215
      %p217 = scmp.ne.s32.totalorder %s205, %s206
      %p218 = scmp.eq.s32.totalorder %s28, 1
      %p219 = por %p217, %p218
      %p221 = scmp.ne.s32.totalorder %s206, %s220
      %p222 = scmp.eq.s32.totalorder %s28, 0
      %p223 = por %p221, %p222
      %s225 = sadd.s32 %s224, 1
      %p228 = scmp.eq.s32.totalorder %s22, 1
      %p229 = scmp.ne.s32.totalorder %s224, %s226
      %p230 = scmp.eq.s32.totalorder %s22, 0
      %p231 = por %p229, %p230
      %p232 = scmp.ne.s32.totalorder %s224, %s226
      %p233 = scmp.eq.s32.totalorder %s27, 1
      %p234 = por %p232, %p233
      %p235 = scmp.ne.s32.totalorder %s226, %s227
      %p236 = scmp.eq.s32.totalorder %s27, 0
      %p237 = por %p235, %p236
      %p238 = scmp.ne.s32.totalorder %s226, %s227
      %p239 = scmp.eq.s32.totalorder %s28, 1
      %p240 = por %p238, %p239
      %p242 = scmp.ne.s32.totalorder %s227, %s241
      %p243 = scmp.eq.s32.totalorder %s28, 0
      %p244 = por %p242, %p243
      %s246 = sadd.s32 %s245, 1
      %p249 = scmp.eq.s32.totalorder %s22, 1
      %p250 = scmp.ne.s32.totalorder %s245, %s247
      %p251 = scmp.eq.s32.totalorder %s22, 0
      %p252 = por %p250, %p251
      %p253 = scmp.ne.s32.totalorder %s245, %s247
      %p254 = scmp.eq.s32.totalorder %s27, 1
      %p255 = por %p253, %p254
      %p256 = scmp.ne.s32.totalorder %s247, %s248
      %p257 = scmp.eq.s32.totalorder %s27, 0
      %p258 = por %p256, %p257
      %p259 = scmp.ne.s32.totalorder %s247, %s248
      %p260 = scmp.eq.s32.totalorder %s28, 1
      %p261 = por %p259, %p260
      %p263 = scmp.ne.s32.totalorder %s248, %s262
      %p264 = scmp.eq.s32.totalorder %s28, 0
      %p265 = por %p263, %p264
      %s266 = ssub.s32 %s22, %s29
      %p267 = scmp.eq.s32.totalorder %s266, 0
      %s269 = sadd.s32 %s268, 1
      %s270 = scalar_select %p267, %s268, %s269
      %p273 = pneg %p267
      %p274 = scmp.eq.s32.totalorder %s22, 1
      %p275 = por %p273, %p274
      %p276 = scmp.ne.s32.totalorder %s268, %s271
      %p277 = scmp.eq.s32.totalorder %s22, 0
      %p278 = por %p276, %p277
      %p279 = scmp.ne.s32.totalorder %s268, %s271
      %p280 = scmp.eq.s32.totalorder %s27, 1
      %p281 = por %p279, %p280
      %p282 = scmp.ne.s32.totalorder %s271, %s272
      %p283 = scmp.eq.s32.totalorder %s27, 0
      %p284 = por %p282, %p283
      %p285 = scmp.ne.s32.totalorder %s271, %s272
      %p286 = scmp.eq.s32.totalorder %s28, 1
      %p287 = por %p285, %p286
      %p289 = scmp.ne.s32.totalorder %s272, %s288
      %p290 = scmp.eq.s32.totalorder %s28, 0
      %p291 = por %p289, %p290
      %p292 = scmp.le.s32.totalorder 1, %s22
      %p293 = scmp.lt.s32.totalorder %s22, 3
      %p294 = pnand %p292, %p293
      %p295 = pneg %p294
      // Predicated region
      $region9: #{tpu_custom_call.1} parent=5 // pred_check
        _
      $region10: #{tpu_custom_call.1} parent=5 // pred_check_branch
        %297 = sbr.rel (%p294) target = $region12
      $region11: #{tpu_custom_call.1} parent=5 // pred_region
        %s298 = ssub.s32 %s22, 1
        // Predicated region
        $region13: #{tpu_custom_call.1} parent=11 // pred_check
          %p299 = pneg %p69
        $region14: #{tpu_custom_call.1} parent=11 // pred_check_branch
          %301 = sbr.rel (%p299) target = $region16
        $region15: #{tpu_custom_call.1} parent=11 // pred_region
          _
        $region16: #{tpu_custom_call.1} parent=11 // pred_fallthru
          _
        // Predicated region
        $region17: #{tpu_custom_call.1} parent=11 // pred_check
          %p302 = pneg %p90
        $region18: #{tpu_custom_call.1} parent=11 // pred_check_branch
          %304 = sbr.rel (%p302) target = $region20
        $region19: #{tpu_custom_call.1} parent=11 // pred_region
          _
        $region20: #{tpu_custom_call.1} parent=11 // pred_fallthru
          _
        // Predicated region
        $region21: #{tpu_custom_call.1} parent=11 // pred_check
          %p305 = pneg %p111
        $region22: #{tpu_custom_call.1} parent=11 // pred_check_branch
          %307 = sbr.rel (%p305) target = $region24
        $region23: #{tpu_custom_call.1} parent=11 // pred_region
          _
        $region24: #{tpu_custom_call.1} parent=11 // pred_fallthru
          _
        // Predicated region
        $region25: #{tpu_custom_call.1} parent=11 // pred_check
          %p308 = pneg %p132
        $region26: #{tpu_custom_call.1} parent=11 // pred_check_branch
          %310 = sbr.rel (%p308) target = $region28
        $region27: #{tpu_custom_call.1} parent=11 // pred_region
          _
        $region28: #{tpu_custom_call.1} parent=11 // pred_fallthru
          _
        // Predicated region
        $region29: #{tpu_custom_call.1} parent=11 // pred_check
          %p311 = pneg %p153
        $region30: #{tpu_custom_call.1} parent=11 // pred_check_branch
          %313 = sbr.rel (%p311) target = $region32
        $region31: #{tpu_custom_call.1} parent=11 // pred_region
          _
        $region32: #{tpu_custom_call.1} parent=11 // pred_fallthru
          _
        // Predicated region
        $region33: #{tpu_custom_call.1} parent=11 // pred_check
          %p314 = pneg %p174
        $region34: #{tpu_custom_call.1} parent=11 // pred_check_branch
          %316 = sbr.rel (%p314) target = $region36
        $region35: #{tpu_custom_call.1} parent=11 // pred_region
          _
        $region36: #{tpu_custom_call.1} parent=11 // pred_fallthru
          _
        // Predicated region
        $region37: #{tpu_custom_call.1} parent=11 // pred_check
          %p317 = pneg %p195
        $region38: #{tpu_custom_call.1} parent=11 // pred_check_branch
          %319 = sbr.rel (%p317) target = $region40
        $region39: #{tpu_custom_call.1} parent=11 // pred_region
          _
        $region40: #{tpu_custom_call.1} parent=11 // pred_fallthru
          _
        // Predicated region
        $region41: #{tpu_custom_call.1} parent=11 // pred_check
          %p320 = pneg %p216
        $region42: #{tpu_custom_call.1} parent=11 // pred_check_branch
          %322 = sbr.rel (%p320) target = $region44
        $region43: #{tpu_custom_call.1} parent=11 // pred_region
          _
        $region44: #{tpu_custom_call.1} parent=11 // pred_fallthru
          _
        // Predicated region
        $region45: #{tpu_custom_call.1} parent=11 // pred_check
          %p323 = pneg %p237
        $region46: #{tpu_custom_call.1} parent=11 // pred_check_branch
          %325 = sbr.rel (%p323) target = $region48
        $region47: #{tpu_custom_call.1} parent=11 // pred_region
          _
        $region48: #{tpu_custom_call.1} parent=11 // pred_fallthru
          _
        // Predicated region
        $region49: #{tpu_custom_call.1} parent=11 // pred_check
          %p326 = pneg %p258
        $region50: #{tpu_custom_call.1} parent=11 // pred_check_branch
          %328 = sbr.rel (%p326) target = $region52
        $region51: #{tpu_custom_call.1} parent=11 // pred_region
          _
        $region52: #{tpu_custom_call.1} parent=11 // pred_fallthru
          _
      $region12: #{tpu_custom_call.1} parent=5 // pred_fallthru
        _
      %p329 = scmp.lt.s32.totalorder %s22, 2
      // Predicated region
      $region53: #{tpu_custom_call.1} parent=5 // pred_check
        %p330 = pneg %p329
      $region54: #{tpu_custom_call.1} parent=5 // pred_check_branch
        %332 = sbr.rel (%p330) target = $region56
      $region55: #{tpu_custom_call.1} parent=5 // pred_region
        // Predicated region
        $region57: #{tpu_custom_call.1} parent=55 // pred_check
          %p333 = pneg %p42
        $region58: #{tpu_custom_call.1} parent=55 // pred_check_branch
          %335 = sbr.rel (%p333) target = $region60
        $region59: #{tpu_custom_call.1} parent=55 // pred_region
          %p336 = scmp.lt.s32.totalorder %s22, 1
          %s337 = scalar_select %p336, %s22, 1
          %s338 = smul.addr %s337, 8
          %s339 = scalar_lea.vmem %s0, %s338
        $region60: #{tpu_custom_call.1} parent=55 // pred_fallthru
          _
      $region56: #{tpu_custom_call.1} parent=5 // pred_fallthru
        _
      %p340 = scmp.le.s32.totalorder 1, %s22
      %p341 = scmp.lt.s32.totalorder %s22, 3
      %p342 = pnand %p340, %p341
      %p343 = pneg %p342
      // Predicated region
      $region61: #{tpu_custom_call.1} parent=5 // pred_check
        _
      $region62: #{tpu_custom_call.1} parent=5 // pred_check_branch
        %345 = sbr.rel (%p342) target = $region64
      $region63: #{tpu_custom_call.1} parent=5 // pred_region
        %s346 = ssub.s32 %s22, 1
        %p347 = scmp.lt.s32.totalorder %s27, 1
        %s348 = scalar_select %p347, %s27, 1
        %s349 = smul.addr %s348, 8
        %s350 = scalar_lea.vmem %s0, %s349
        %p351 = pneg %p48
        %p352 = pneg %p45
        %p353 = pneg %p69
        %p354 = pneg %p66
        %p355 = pneg %p90
        %p356 = pneg %p87
        %p357 = pneg %p111
        %p358 = pneg %p108
        %p359 = pneg %p132
        %p360 = pneg %p129
        %p361 = pneg %p153
        %p362 = pneg %p150
        %p363 = pneg %p174
        %p364 = pneg %p171
        %p365 = pneg %p195
        %p366 = pneg %p192
        %p367 = pneg %p216
        %p368 = pneg %p213
        %p369 = pneg %p237
        %p370 = pneg %p234
        %p371 = pneg %p258
        %p372 = pneg %p255
        %p373 = pneg %p284
        %p374 = pneg %p281
        %s375 = sand.u32 %s271, 1
        %s376 = scalar_lea.sflag [#allocation4], %s375
        %s377 = sand.u32 %s271, 1
        %s378 = scalar_lea.vmem [#allocation3], %s377
        %p379 = scmp.lt.s32.totalorder %s27, 1
        %s380 = scalar_select %p379, %s27, 1
        %s381 = smul.addr %s380, 8
        %s382 = scalar_lea.vmem %s0, %s381
        %v383 = vld [vmem:[%s382] sm:$0xff]
        %v384 = vld [vmem:[%s1] sm:$0xff]
        %v385 = vld [vmem:[%s1 + $0x8] sm:$0xff]
        %v386 = vld [vmem:[%s1 + $0x10] sm:$0xff]
        %v387 = vld [vmem:[%s1 + $0x18] sm:$0xff]
        %v388 = vld [vmem:[%s1 + $0x20] sm:$0xff]
        %v389 = vld [vmem:[%s1 + $0x28] sm:$0xff]
        %v390 = vld [vmem:[%s1 + $0x30] sm:$0xff]
        %v391 = vld [vmem:[%s1 + $0x38] sm:$0xff]
        %v392 = vld [vmem:[%s1 + $0x40] sm:$0xff]
        %v393 = vld [vmem:[%s1 + $0x48] sm:$0xff]
        %v394 = vld [vmem:[%s1 + $0x50] sm:$0xff]
        %v395 = vld [vmem:[%s1 + $0x58] sm:$0xff]
        %v396 = vld [vmem:[%s2] sm:$0x1]
        %v397 = vld [vmem:[%s3] sm:$0x1]
        %v398 = vld [vmem:[%s4] sm:$0x1]
        %v399 = vld [vmem:[%s5] sm:$0xff]
        %v400 = vld [vmem:[%s5 + $0x8] sm:$0xff]
        %v401 = vld [vmem:[%s5 + $0x10] sm:$0xff]
        %v402 = vld [vmem:[%s5 + $0x18] sm:$0xff]
        %v403 = vld [vmem:[%s5 + $0x20] sm:$0xff]
        %v404 = vld [vmem:[%s5 + $0x28] sm:$0xff]
        %v405 = vld [vmem:[%s5 + $0x30] sm:$0xff]
        %v406 = vld [vmem:[%s5 + $0x38] sm:$0xff]
        %v407 = vld [vmem:[%s5 + $0x40] sm:$0xff]
        %v408 = vld [vmem:[%s5 + $0x48] sm:$0xff]
        %v409 = vld [vmem:[%s5 + $0x50] sm:$0xff]
        %v410 = vld [vmem:[%s5 + $0x58] sm:$0xff]
        %v411 = vld [vmem:[%s5 + $0x60] sm:$0xff]
        %v412 = vld [vmem:[%s5 + $0x68] sm:$0xff]
        %v413 = vld [vmem:[%s5 + $0x70] sm:$0xff]
        %v414 = vld [vmem:[%s5 + $0x78] sm:$0xff]
        %v415 = vld [vmem:[%s5 + $0x80] sm:$0xff]
        %v416 = vld [vmem:[%s5 + $0x88] sm:$0xff]
        %v417 = vld [vmem:[%s5 + $0x90] sm:$0xff]
        %v418 = vld [vmem:[%s5 + $0x98] sm:$0xff]
        %v419 = vld [vmem:[%s5 + $0xa0] sm:$0xff]
        %v420 = vld [vmem:[%s5 + $0xa8] sm:$0xff]
        %v421 = vld [vmem:[%s5 + $0xb0] sm:$0xff]
        %v422 = vld [vmem:[%s5 + $0xb8] sm:$0xff]
        %v423 = vld [vmem:[%s6] sm:$0x1]
        %v424 = vld [vmem:[%s7] sm:$0x1]
        %v425 = vld [vmem:[%s8] sm:$0x1]
        %v426 = vld [vmem:[%s9] sm:$0x1]
        %v427 = vld [vmem:[#allocation2] sm:$0x1]
        %v428 = vlaneseq
        %v429 = vshrl.u32 %v428, 7
        %vm430 = vcmp.eq.s32.totalorder %v429, 0
        %v431 = vrot.slane %v383, 7
        %v432 = vsel %vm430, 1, 0
        %vm433 = vcmp.eq.s32.totalorder %v432, 1
        %v434 = vsel %vm433, 0.0, %v431
        %vm435 = vcmp.eq.s32.totalorder %v429, 7
        %v436 = vrot.slane %v383, 1
        %v437 = vsel %vm435, 1, 0
        %vm438 = vcmp.eq.s32.totalorder %v437, 1
        %v439 = vsel %vm438, 0.0, %v436
        %441 = vrot.lane.b32.xlu0 %v383, 32
        %v442 = vpop.permute.xlu0 %441
        %445 = vrot.lane.b32.xlu0 %v439, 64
        %v446 = vpop.permute.xlu0 %445
        %vm448 = vcmask 261120
        %v449 = vsel %vm448, %v434, %v442
        %vm450 = vcmask 523264
        %v451 = vsel %vm450, %v449, %v446
        %v453 = vlaneseq
        %v454 = vshrl.u32 %v453, 7
        %v455 = vsub.s32 0, %v454
        %v456 = vrot.slane %v396, %v455
        %vm458 = vcmask 785408
        %v460 = vsel %vm458, %v451, 0
        %462 = vmatprep.subr.mxu0 0.0
        %463 = vmatpush1.msra.mxu0 %v384
        %464 = vmatprep.subr.mxu0 0.0
        %465 = vmatpush1.msra.mxu0 %v385
        %466 = vmatprep.subr.mxu0 0.0
        %467 = vmatpush1.msra.mxu0 %v386
        %468 = vmatprep.subr.mxu0 0.0
        %469 = vmatpush1.msra.mxu0 %v387
        %470 = vmatprep.subr.mxu0 0.0
        %471 = vmatpush1.msra.mxu0 %v388
        %472 = vmatprep.subr.mxu0 0.0
        %473 = vmatpush1.msra.mxu0 %v389
        %474 = vmatprep.subr.mxu0 0.0
        %475 = vmatpush1.msra.mxu0 %v390
        %476 = vmatprep.subr.mxu0 0.0
        %477 = vmatpush1.msra.mxu0 %v391
        %478 = vmatprep.subr.mxu0 0.0
        %479 = vmatpush1.msra.mxu0 %v392
        %480 = vmatprep.subr.mxu0 0.0
        %481 = vmatpush1.msra.mxu0 %v393
        %482 = vmatprep.subr.mxu0 0.0
        %483 = vmatpush1.msra.mxu0 %v394
        %484 = vmatprep.subr.mxu0 0.0
        %485 = vmatpush1.msra.mxu0 %v395
        %486 = vmatprep.subr.mxu0 0.0
        %487 = vmatpush1.msra.mxu0 0.0
        %488 = vmatprep.subr.mxu0 0.0
        %489 = vmatpush1.msra.mxu0 0.0
        %490 = vmatprep.subr.mxu0 0.0
        %491 = vmatpush1.msra.mxu0 0.0
        %492 = vmatprep.subr.mxu0 0.0
        %493 = vmatpush1.msra.mxu0 0.0
        %494 = vmatprep.subr.mxu0 0.0
        %495 = vmatpush1.msra.mxu0 0.0
        %496 = vmatprep.subr.mxu0 0.0
        %497 = vmatpush1.msra.mxu0 0.0
        %498 = vmatprep.subr.mxu0 0.0
        %499 = vmatpush1.msra.mxu0 0.0
        %500 = vmatprep.subr.mxu0 0.0
        %501 = vmatpush1.msra.mxu0 0.0
        %502 = vmatprep.subr.mxu0 0.0
        %503 = vmatpush1.msra.mxu0 0.0
        %504 = vmatprep.subr.mxu0 0.0
        %505 = vmatpush1.msra.mxu0 0.0
        %506 = vmatprep.subr.mxu0 0.0
        %507 = vmatpush1.msra.mxu0 0.0
        %508 = vmatprep.subr.mxu0 0.0
        %509 = vmatpush1.msra.mxu0 0.0
        %510 = vmatprep.subr.mxu0 0.0
        %511 = vmatpush1.msra.mxu0 0.0
        %512 = vmatprep.subr.mxu0 0.0
        %513 = vmatpush1.msra.mxu0 0.0
        %514 = vmatprep.subr.mxu0 0.0
        %515 = vmatpush1.msra.mxu0 0.0
        %516 = vmatprep.subr.mxu0 0.0
        %517 = vmatpush1.msra.mxu0 0.0
        %518 = vmatprep.subr.mxu0 0.0
        %519 = vmatpush1.msra.mxu0 0.0
        %520 = vmatprep.subr.mxu0 0.0
        %521 = vmatpush1.msra.mxu0 0.0
        %522 = vmatprep.subr.mxu0 0.0
        %523 = vmatpush1.msra.mxu0 0.0
        %524 = vmatprep.subr.mxu0 0.0
        %525 = vmatpush1.msra.mxu0 0.0
        %526 = vmatprep.mubr.f32.mxu0 0.0
        %527 = vmatmul.mubr.f32.gmra.mrb[0].mxu0 %v460
        %v528 = vpop.f32.mrb[0].mxu0
        %v529 = vadd.f32 %v456, %v528
        %v530 = vpop.f32.mrb[0].mxu0
        %531 = vdwg.mxu0
        %v532 = vsel %vm450, %v529, 0.0
        %533 = vadd.xlane.f32.xlu0 %v532
        %v534 = vpop.xlane.xlu0 %533
        %v535 = vrcp.pop 64.0
        %v536 = vmul.f32 %v534, %v535
        %v537 = vsub.f32 %v529, %v536
        %v538 = vmul.f32 %v537, %v537
        %v539 = vsel %vm450, %v538, 0.0
        %540 = vadd.xlane.f32.xlu0 %v539
        %v541 = vpop.xlane.xlu0 %540
        %v542 = vmul.f32 %v541, %v535
        %v543 = vadd.f32 %v542, 1e-05
        %v544 = vrsqrt.pop %v543
        %v545 = vmul.f32 %v537, %v544
        %v547 = vlaneseq
        %v548 = vshrl.u32 %v547, 7
        %v549 = vsub.s32 0, %v548
        %v550 = vrot.slane %v397, %v549
        %v552 = vmul.f32 %v545, %v550
        %v554 = vlaneseq
        %v555 = vshrl.u32 %v554, 7
        %v556 = vsub.s32 0, %v555
        %v557 = vrot.slane %v398, %v556
        %v559 = vadd.f32 %v552, %v557
        %v560 = vmax.f32 %v559, 0.0
        %v561 = vrot.slane %v560, 7
        %v562 = vsel %vm433, 0.0, %v561
        %v563 = vrot.slane %v560, 1
        %v564 = vsel %vm438, 0.0, %v563
        %566 = vrot.lane.b32.xlu0 %v560, 64
        %v567 = vpop.permute.xlu0 %566
        %v569 = vsel %vm450, %v562, %v567
        %v571 = vlaneseq
        %v572 = vshrl.u32 %v571, 7
        %v573 = vsub.s32 0, %v572
        %v574 = vrot.slane %v423, %v573
        %v577 = vsel %vm450, %v564, 0
        %579 = vmatprep.subr.mxu0 0.0
        %580 = vmatpush1.msra.mxu0 %v399
        %581 = vmatprep.subr.mxu0 0.0
        %582 = vmatpush1.msra.mxu0 %v400
        %583 = vmatprep.subr.mxu0 0.0
        %584 = vmatpush1.msra.mxu0 %v401
        %585 = vmatprep.subr.mxu0 0.0
        %586 = vmatpush1.msra.mxu0 %v402
        %587 = vmatprep.subr.mxu0 0.0
        %588 = vmatpush1.msra.mxu0 %v403
        %589 = vmatprep.subr.mxu0 0.0
        %590 = vmatpush1.msra.mxu0 %v404
        %591 = vmatprep.subr.mxu0 0.0
        %592 = vmatpush1.msra.mxu0 %v405
        %593 = vmatprep.subr.mxu0 0.0
        %594 = vmatpush1.msra.mxu0 %v406
        %595 = vmatprep.subr.mxu0 0.0
        %596 = vmatpush1.msra.mxu0 %v407
        %597 = vmatprep.subr.mxu0 0.0
        %598 = vmatpush1.msra.mxu0 %v408
        %599 = vmatprep.subr.mxu0 0.0
        %600 = vmatpush1.msra.mxu0 %v409
        %601 = vmatprep.subr.mxu0 0.0
        %602 = vmatpush1.msra.mxu0 %v410
        %603 = vmatprep.subr.mxu0 0.0
        %604 = vmatpush1.msra.mxu0 %v411
        %605 = vmatprep.subr.mxu0 0.0
        %606 = vmatpush1.msra.mxu0 %v412
        %607 = vmatprep.subr.mxu0 0.0
        %608 = vmatpush1.msra.mxu0 %v413
        %609 = vmatprep.subr.mxu0 0.0
        %610 = vmatpush1.msra.mxu0 %v414
        %611 = vmatprep.subr.mxu0 0.0
        %612 = vmatpush1.msra.mxu0 %v415
        %613 = vmatprep.subr.mxu0 0.0
        %614 = vmatpush1.msra.mxu0 %v416
        %615 = vmatprep.subr.mxu0 0.0
        %616 = vmatpush1.msra.mxu0 %v417
        %617 = vmatprep.subr.mxu0 0.0
        %618 = vmatpush1.msra.mxu0 %v418
        %619 = vmatprep.subr.mxu0 0.0
        %620 = vmatpush1.msra.mxu0 %v419
        %621 = vmatprep.subr.mxu0 0.0
        %622 = vmatpush1.msra.mxu0 %v420
        %623 = vmatprep.subr.mxu0 0.0
        %624 = vmatpush1.msra.mxu0 %v421
        %625 = vmatprep.subr.mxu0 0.0
        %626 = vmatpush1.msra.mxu0 %v422
        %627 = vmatprep.subr.mxu0 0.0
        %628 = vmatpush1.msra.mxu0 0.0
        %629 = vmatprep.subr.mxu0 0.0
        %630 = vmatpush1.msra.mxu0 0.0
        %631 = vmatprep.subr.mxu0 0.0
        %632 = vmatpush1.msra.mxu0 0.0
        %633 = vmatprep.subr.mxu0 0.0
        %634 = vmatpush1.msra.mxu0 0.0
        %635 = vmatprep.subr.mxu0 0.0
        %636 = vmatpush1.msra.mxu0 0.0
        %637 = vmatprep.subr.mxu0 0.0
        %638 = vmatpush1.msra.mxu0 0.0
        %639 = vmatprep.subr.mxu0 0.0
        %640 = vmatpush1.msra.mxu0 0.0
        %641 = vmatprep.subr.mxu0 0.0
        %642 = vmatpush1.msra.mxu0 0.0
        %643 = vmatprep.mubr.f32.mxu0 %v577
        %644 = vmatmul.mubr.f32.gmra.mrb[0].mxu0 %v569
        %v645 = vpop.f32.mrb[0].mxu0
        %v646 = vadd.f32 %v574, %v645
        %v647 = vpop.f32.mrb[0].mxu0
        %648 = vdwg.mxu0
        %v649 = vsel %vm450, %v646, 0.0
        %650 = vadd.xlane.f32.xlu0 %v649
        %v651 = vpop.xlane.xlu0 %650
        %v652 = vmul.f32 %v651, %v535
        %v653 = vsub.f32 %v646, %v652
        %v654 = vmul.f32 %v653, %v653
        %v655 = vsel %vm450, %v654, 0.0
        %656 = vadd.xlane.f32.xlu0 %v655
        %v657 = vpop.xlane.xlu0 %656
        %v658 = vmul.f32 %v657, %v535
        %v659 = vadd.f32 %v658, 1e-05
        %v660 = vrsqrt.pop %v659
        %v661 = vmul.f32 %v653, %v660
        %v663 = vlaneseq
        %v664 = vshrl.u32 %v663, 7
        %v665 = vsub.s32 0, %v664
        %v666 = vrot.slane %v424, %v665
        %v668 = vmul.f32 %v661, %v666
        %v670 = vlaneseq
        %v671 = vshrl.u32 %v670, 7
        %v672 = vsub.s32 0, %v671
        %v673 = vrot.slane %v425, %v672
        %v675 = vadd.f32 %v668, %v673
        %v676 = vmax.f32 %v675, 0.0
        %678 = vset.pattern.permute.xlu0 0
        %679 = vperm.xlu0 %678, %v427
        %v680 = vpop.permute.xlu0 %679
        %v682 = vlaneseq
        %v683 = vshrl.u32 %v682, 7
        %v684 = vsub.s32 0, %v683
        %v685 = vrot.slane %v680, %v684
        %v687 = vsel %vm450, %v426, 0
        %v690 = vsel %vm450, %v676, 0
        %692 = vmatprep.subr.mxu0 0.0
        %693 = vmatpush1.xpose.msra.mxu0 %v690
        %694 = vmatprep.subr.mxu0 0.0
        %695 = vmatpush1.xpose.msra.mxu0 0.0
        %696 = vmatprep.subr.mxu0 0.0
        %697 = vmatpush1.xpose.msra.mxu0 0.0
        %698 = vmatprep.subr.mxu0 0.0
        %699 = vmatpush1.xpose.msra.mxu0 0.0
        %700 = vmatprep.subr.mxu0 0.0
        %701 = vmatpush1.xpose.msra.mxu0 0.0
        %702 = vmatprep.subr.mxu0 0.0
        %703 = vmatpush1.xpose.msra.mxu0 0.0
        %704 = vmatprep.subr.mxu0 0.0
        %705 = vmatpush1.xpose.msra.mxu0 0.0
        %706 = vmatprep.subr.mxu0 0.0
        %707 = vmatpush1.xpose.msra.mxu0 0.0
        %708 = vmatprep.subr.mxu0 0.0
        %709 = vmatpush1.xpose.msra.mxu0 0.0
        %710 = vmatprep.subr.mxu0 0.0
        %711 = vmatpush1.xpose.msra.mxu0 0.0
        %712 = vmatprep.subr.mxu0 0.0
        %713 = vmatpush1.xpose.msra.mxu0 0.0
        %714 = vmatprep.subr.mxu0 0.0
        %715 = vmatpush1.xpose.msra.mxu0 0.0
        %716 = vmatprep.subr.mxu0 0.0
        %717 = vmatpush1.xpose.msra.mxu0 0.0
        %718 = vmatprep.subr.mxu0 0.0
        %719 = vmatpush1.xpose.msra.mxu0 0.0
        %720 = vmatprep.subr.mxu0 0.0
        %721 = vmatpush1.xpose.msra.mxu0 0.0
        %722 = vmatprep.subr.mxu0 0.0
        %723 = vmatpush1.xpose.msra.mxu0 0.0
        %724 = vmatprep.subr.mxu0 0.0
        %725 = vmatpush1.xpose.msra.mxu0 0.0
        %726 = vmatprep.subr.mxu0 0.0
        %727 = vmatpush1.xpose.msra.mxu0 0.0
        %728 = vmatprep.subr.mxu0 0.0
        %729 = vmatpush1.xpose.msra.mxu0 0.0
        %730 = vmatprep.subr.mxu0 0.0
        %731 = vmatpush1.xpose.msra.mxu0 0.0
        %732 = vmatprep.subr.mxu0 0.0
        %733 = vmatpush1.xpose.msra.mxu0 0.0
        %734 = vmatprep.subr.mxu0 0.0
        %735 = vmatpush1.xpose.msra.mxu0 0.0
        %736 = vmatprep.subr.mxu0 0.0
        %737 = vmatpush1.xpose.msra.mxu0 0.0
        %738 = vmatprep.subr.mxu0 0.0
        %739 = vmatpush1.xpose.msra.mxu0 0.0
        %740 = vmatprep.subr.mxu0 0.0
        %741 = vmatpush1.xpose.msra.mxu0 0.0
        %742 = vmatprep.subr.mxu0 0.0
        %743 = vmatpush1.xpose.msra.mxu0 0.0
        %744 = vmatprep.subr.mxu0 0.0
        %745 = vmatpush1.xpose.msra.mxu0 0.0
        %746 = vmatprep.subr.mxu0 0.0
        %747 = vmatpush1.xpose.msra.mxu0 0.0
        %748 = vmatprep.subr.mxu0 0.0
        %749 = vmatpush1.xpose.msra.mxu0 0.0
        %750 = vmatprep.subr.mxu0 0.0
        %751 = vmatpush1.xpose.msra.mxu0 0.0
        %752 = vmatprep.subr.mxu0 0.0
        %753 = vmatpush1.xpose.msra.mxu0 0.0
        %754 = vmatprep.subr.mxu0 0.0
        %755 = vmatpush1.xpose.msra.mxu0 0.0
        %756 = vmatprep.mubr.f32.mxu0 0.0
        %757 = vmatmul.mubr.f32.gmra.mrb[0].mxu0 %v687
        %v758 = vpop.f32.mrb[0].mxu0
        %v759 = vadd.f32 %v685, %v758
        %v760 = vpop.f32.mrb[0].mxu0
        %761 = vdwg.mxu0
        %v762 = vmax.f32 %v759, 0.0
        %vm763 = vcmask 57344
        %764 = vst.msk [vmem:[%s378] sm:$0x1] %vm763, %v762
        %s765 = sand.u32 %s271, 1
        %s766 = scalar_lea.sflag [#allocation4], %s765
        %s767 = sand.u32 %s271, 1
        %s768 = scalar_lea.vmem [#allocation3], %s767
        // Predicated region
        $region65: #{tpu_custom_call.1} parent=63 // pred_check
          %p769 = pneg %p281
        $region66: #{tpu_custom_call.1} parent=63 // pred_check_branch
          %771 = sbr.rel (%p769) target = $region68
        $region67: #{tpu_custom_call.1} parent=63 // pred_region
          %s773 = ssub.s32 16, 16
          %774 = vsyncadd %s766, %s773
          %s775 = smul.addr %s27, 16
          %s776 = scalar_lea.hbm %s11, %s775
          %s778 = sshll.u32 %s768, 4
          %s779 = int_to_ptr.vmem [resolvable:$true] %s778
          %781 = dma.vmem_to_hbm [thread:$0]  %s779, 16, %s776, %s766
        $region68: #{tpu_custom_call.1} parent=63 // pred_fallthru
          _
      $region64: #{tpu_custom_call.1} parent=5 // pred_fallthru
        _
      %p782 = scmp.le.s32.totalorder 2, %s22
      // Predicated region
      $region69: #{tpu_custom_call.1} parent=5 // pred_check
        %p783 = pneg %p782
      $region70: #{tpu_custom_call.1} parent=5 // pred_check_branch
        %785 = sbr.rel (%p783) target = $region72
      $region71: #{tpu_custom_call.1} parent=5 // pred_region
        %s786 = ssub.s32 %s22, 2
        // Predicated region
        $region73: #{tpu_custom_call.1} parent=71 // pred_check
          %p787 = pneg %p287
        $region74: #{tpu_custom_call.1} parent=71 // pred_check_branch
          %789 = sbr.rel (%p787) target = $region76
        $region75: #{tpu_custom_call.1} parent=71 // pred_region
          %s790 = sand.u32 %s272, 1
          %s791 = scalar_lea.sflag [#allocation4], %s790
          %s792 = sand.u32 %s272, 1
          %s793 = scalar_lea.vmem [#allocation3], %s792
          %794 = dma.done %s791, 16
        $region76: #{tpu_custom_call.1} parent=71 // pred_fallthru
          _
      $region72: #{tpu_custom_call.1} parent=5 // pred_fallthru
        _
    $region6: #{tpu_custom_call.1} parent=1 // loop_footer
      %s26 = sadd.s32 1, %s22
    $region7: #{tpu_custom_call.1} parent=1 // loop_footer_branch
      %21 = sbr.rel target = $region3
    $region8: #{tpu_custom_call.1} parent=1 // loop_exit
      _
    %795 = vsyncpa [#allocation4], 1
    %s796 = scalar_lea.sflag [#allocation4], 1
    %797 = vsyncpa %s796, 1

</llo_original>
